<compile_context>
chip_gen: v7x
topology: tpu7x:2x2x1
jax: 0.10.0
libtpu: 0.0.40
codegen_flags: <defaults>
</compile_context>

<pallas_src>
import functools

import jax
import jax.numpy as jnp
from jax.experimental import pallas as pl
from jax.experimental.pallas import tpu as pltpu


# ----------------------------------------------------------------------------- kernel
def _modified_smooth_l1_kernel(t_ref, p_ref, o_ref, *, alpha: float):
    # Purely elementwise; ~9 VALU ops / vreg are fully hidden under the HBM DMA.
    diff = jnp.abs(t_ref[...] - p_ref[...])
    quad = (0.5 * alpha) * diff * diff            # 0.5 * alpha * diff^2
    lin = diff - (0.5 / alpha)                    # diff - 0.5/alpha
    loss = jnp.where(diff <= (1.0 / alpha), quad, lin)
    o_ref[...] = jnp.where(diff <= 0.01, jnp.zeros_like(loss), loss)


# --------------------------------------------------------------------- host-side utils
def _cdiv(a: int, b: int) -> int:
    return -(-a // b)


def _round_up(a: int, m: int) -> int:
    return _cdiv(a, m) * m


def _per_array_block_bytes() -> int:
    """Generation-aware per-array block budget.

    3 arrays x 2 pipeline buffers x block must fit the default scoped-VMEM limit
    (16 MiB v5e / 32 MiB v6e / 32 MiB v7x), so no vmem_limit_bytes override is needed.
    """
    kind = ""
    try:
        kind = jax.devices()[0].device_kind.lower()
    except Exception:  # e.g. interpret mode / no device query
        pass
    if "v7" in kind:
        return 4 << 20   # 24 MiB total; amortizes per-step cost against ~3.2 TB/s HBM
    if "v6" in kind:
        return 2 << 20   # 12 MiB total; past the measured ~85% roofline knee
    if "v5" in kind:
        return 1 << 20   # 6 MiB total; v5e scoped-VMEM default is only 16 MiB
    return 2 << 20       # unknown backend: safe middle ground


def _tile_rows_and_grid(rows: int, lanes: int, itemsize: int, sub_mult: int,
                        block_bytes: int):
    """Pick a sublane-aligned row tile and 1-D grid size.

    Ensures >= 2 grid programs (prefer an even count) whenever the array is large
    enough to split on a sublane boundary, so both v7x TensorCores get work.
    """
    if rows <= sub_mult:
        return rows, 1                                  # single full-extent block
    tile_rows = max(sub_mult,
                    (block_bytes // (lanes * itemsize)) // sub_mult * sub_mult)
    # Cap at ~half the rows (sublane-aligned) => at least 2 programs.
    half = _round_up(_cdiv(rows, 2), sub_mult)
    tile_rows = min(tile_rows, half)
    nblocks = _cdiv(rows, tile_rows)
    # Prefer an even program count so neither TC gets a lone extra (partial) block.
    if nblocks > 1 and nblocks % 2 == 1:
        cand = _round_up(_cdiv(rows, nblocks + 1), sub_mult)
        if sub_mult <= cand < rows and _cdiv(rows, cand) % 2 == 0:
            tile_rows = cand
            nblocks = _cdiv(rows, cand)
    return tile_rows, nblocks


# ------------------------------------------------------------------------ pallas glue
def _elementwise_call(kernel, t2, p2, tile_shape, grid):
    """Shared pallas_call plumbing for a 2-D lane-dense view."""
    rows, lanes = t2.shape
    spec = pl.BlockSpec(tile_shape, lambda i: (i, 0))
    return pl.pallas_call(
        kernel,
        out_shape=jax.ShapeDtypeStruct((rows, lanes), t2.dtype),
        grid_spec=pltpu.PrefetchScalarGridSpec(
            num_scalar_prefetch=0,
            grid=grid,
            in_specs=[spec, spec],
            out_specs=pl.BlockSpec(tile_shape, lambda i: (i, 0)),
        ),
        compiler_params=pltpu.CompilerParams(
            dimension_semantics=("parallel",)),
    )(t2, p2)


def _run_lane_dense(kernel, t_flat, p_flat, block_bytes: int):
    """Run the elementwise kernel on a flat array whose size is a multiple of 128."""
    total = t_flat.shape[0]
    dtype = t_flat.dtype
    itemsize = jnp.dtype(dtype).itemsize
    # Native sublane multiple: 8 (f32), 16 (bf16), 32 (int8/fp8).
    sub_mult = max(8, 32 // itemsize)
    lanes = 128
    for cand in (1024, 512, 256):                 # widest lane dim that divides total
        if total % cand == 0:
            lanes = cand
            break
    rows = total // lanes
    tile_rows, nblocks = _tile_rows_and_grid(rows, lanes, itemsize, sub_mult,
                                             block_bytes)
    out2 = _elementwise_call(kernel,
                             t_flat.reshape(rows, lanes),
                             p_flat.reshape(rows, lanes),
                             (tile_rows, lanes), (nblocks,))
    return out2.reshape(total)


def _elementwise_ref(t, p, alpha):
    """Plain-jnp reference (also used for the <=127-element ragged tail)."""
    diff = jnp.abs(t - p)
    loss = jnp.where(diff <= 1.0 / alpha, 0.5 * alpha * diff * diff, diff - 0.5 / alpha)
    return jnp.where(diff <= 0.01, jnp.zeros_like(loss), loss)


# ------------------------------------------------------------------------ public entry
def modified_smooth_l1_loss(normed_targets: jax.Array,
                            pos_reg: jax.Array,
                            alpha: float) -> jax.Array:
    """Elementwise modified smooth-L1 loss, computed in a Pallas TPU kernel."""
    assert normed_targets.shape == pos_reg.shape
    assert normed_targets.dtype == pos_reg.dtype
    alpha = float(alpha)
    if alpha == 0.0:
        raise ValueError("L1_regression_alpha must be non-zero")

    orig_shape = normed_targets.shape
    dtype = normed_targets.dtype
    total = int(normed_targets.size)
    if total == 0:
        return jnp.zeros(orig_shape, dtype)

    kernel = functools.partial(_modified_smooth_l1_kernel, alpha=alpha)
    block_bytes = _per_array_block_bytes()

    flat_t = normed_targets.reshape(-1)
    flat_p = pos_reg.reshape(-1)
    tail = total % 128
    bulk = total - tail

    if bulk == 0:
        # Whole array is < 128 elements: single full-extent (1, total) block.
        out2 = _elementwise_call(kernel,
                                 flat_t.reshape(1, total),
                                 flat_p.reshape(1, total),
                                 (1, total), (1,))
        return out2.reshape(orig_shape)

    bulk_out = _run_lane_dense(kernel, flat_t[:bulk], flat_p[:bulk], block_bytes)
    if tail == 0:
        return bulk_out.reshape(orig_shape)

    # Ragged tail (<128 elements): negligible, compute with plain jnp and stitch.
    tail_out = _elementwise_ref(flat_t[bulk:], flat_p[bulk:], alpha)
    return jnp.concatenate([bulk_out, tail_out]).reshape(orig_shape)


# -------------------------------------------------------------------------------- main
if __name__ == "__main__":
    key = jax.random.PRNGKey(0)
    k1, k2, k3, k4, k5, k6 = jax.random.split(key, 6)

    alpha = 9.0  # L1_regression_alpha from __init__
    loss_fn = jax.jit(lambda a, b: modified_smooth_l1_loss(a, b, alpha))

    # 1) Dense regression head shape: [B, C, H, W] = [2, 4, 16, 16] (lane-dense path).
    shape = (2, 4, 16, 16)
    normed_targets = jax.random.normal(k1, shape, dtype=jnp.float32)
    pos_reg = jax.random.normal(k2, shape, dtype=jnp.float32)
    # Force some elements into the zero-clamp and linear branches.
    pos_reg = pos_reg.at[0, 0, 0, :4].set(normed_targets[0, 0, 0, :4] + 0.005)
    pos_reg = pos_reg.at[0, 1, 0, :4].set(normed_targets[0, 1, 0, :4] + 5.0)

    out = jax.block_until_ready(loss_fn(normed_targets, pos_reg))
    ref = _elementwise_ref(normed_targets, pos_reg, alpha)
    assert out.shape == shape and out.dtype == jnp.float32
    assert jnp.allclose(out, ref, atol=1e-6, rtol=1e-6)

    # 2) Tiny ragged per-anchor targets [N, 4], total < 128 (full-extent (1, total) block).
    shape2 = (13, 4)
    t_r = jax.random.normal(k3, shape2, dtype=jnp.float32)
    p_r = jax.random.normal(k4, shape2, dtype=jnp.float32)
    out_r = jax.block_until_ready(loss_fn(t_r, p_r))
    ref_r = _elementwise_ref(t_r, p_r, alpha)
    assert out_r.shape == shape2 and out_r.dtype == jnp.float32
    assert jnp.allclose(out_r, ref_r, atol=1e-6, rtol=1e-6)

    # 3) Ragged with 128-aligned bulk + tail (37*7 = 259 = 2*128 + 3): bulk Pallas + jnp tail.
    shape3 = (37, 7)
    t_g = jax.random.normal(k5, shape3, dtype=jnp.float32)
    p_g = jax.random.normal(k6, shape3, dtype=jnp.float32)
    out_g = jax.block_until_ready(loss_fn(t_g, p_g))
    ref_g = _elementwise_ref(t_g, p_g, alpha)
    assert out_g.shape == shape3 and out_g.dtype == jnp.float32
    assert jnp.allclose(out_g, ref_g, atol=1e-6, rtol=1e-6)

    # 4) Larger aligned map [4, 8, 32, 32] (32768 elems): exercises the >=2-program grid split.
    shape4 = (4, 8, 32, 32)
    t_b = jax.random.normal(k1, shape4, dtype=jnp.float32)
    p_b = jax.random.normal(k2, shape4, dtype=jnp.float32)
    out_b = jax.block_until_ready(loss_fn(t_b, p_b))
    ref_b = _elementwise_ref(t_b, p_b, alpha)
    assert out_b.shape == shape4 and out_b.dtype == jnp.float32
    assert jnp.allclose(out_b, ref_b, atol=1e-6, rtol=1e-6)

    print("KERNEL_OK")
</pallas_src>

<mosaic_0001>
module attributes {stable_mosaic.version = 11 : i64} {
  func.func @_modified_smooth_l1_kernel(%arg0: i32, %arg1: memref<2x1024xf32, #tpu.memory_space<vmem>>, %arg2: memref<2x1024xf32, #tpu.memory_space<vmem>>, %arg3: memref<2x1024xf32, #tpu.memory_space<vmem>>) attributes {dimension_semantics = [#tpu.dimension_semantics<parallel>], iteration_bounds = array<i64: 1>, scalar_prefetch = 0 : i64, scratch_operands = 0 : i64, tpu.core_type = #tpu.core_type<tc>, window_params = [{transform_indices = @transform_0, window_bounds = array<i64: 2, 1024>}, {transform_indices = @transform_1, window_bounds = array<i64: 2, 1024>}, {transform_indices = @transform_2, window_bounds = array<i64: 2, 1024>}]} {
    %c0 = arith.constant 0 : index
    %c0_0 = arith.constant 0 : index
    %0 = vector.load %arg1[%c0, %c0_0] : memref<2x1024xf32, #tpu.memory_space<vmem>>, vector<2x1024xf32>
    %c0_1 = arith.constant 0 : index
    %c0_2 = arith.constant 0 : index
    %1 = vector.load %arg2[%c0_1, %c0_2] : memref<2x1024xf32, #tpu.memory_space<vmem>>, vector<2x1024xf32>
    %2 = arith.subf %0, %1 : vector<2x1024xf32>
    %3 = math.absf %2 : vector<2x1024xf32>
    %cst = arith.constant 4.500000e+00 : f32
    %4 = vector.broadcast %cst : f32 to vector<2x1024xf32>
    %5 = arith.mulf %4, %3 : vector<2x1024xf32>
    %6 = arith.mulf %5, %3 : vector<2x1024xf32>
    %cst_3 = arith.constant 0.055555556 : f32
    %7 = vector.broadcast %cst_3 : f32 to vector<2x1024xf32>
    %8 = arith.subf %3, %7 : vector<2x1024xf32>
    %cst_4 = arith.constant 0.111111112 : f32
    %9 = vector.broadcast %cst_4 : f32 to vector<2x1024xf32>
    %10 = arith.cmpf ole, %3, %9 : vector<2x1024xf32>
    %11 = arith.select %10, %6, %8 : vector<2x1024xi1>, vector<2x1024xf32>
    %cst_5 = arith.constant 0.00999999977 : f32
    %12 = vector.broadcast %cst_5 : f32 to vector<2x1024xf32>
    %13 = arith.cmpf ole, %3, %12 : vector<2x1024xf32>
    %cst_6 = arith.constant 0.000000e+00 : f32
    %14 = vector.broadcast %cst_6 : f32 to vector<2x1024xf32>
    %15 = arith.select %13, %14, %11 : vector<2x1024xi1>, vector<2x1024xf32>
    %c0_7 = arith.constant 0 : index
    %c0_8 = arith.constant 0 : index
    %16 = vector.load %arg3[%c0_7, %c0_8] : memref<2x1024xf32, #tpu.memory_space<vmem>>, vector<2x1024xf32>
    tpu.vector_store %arg3[%c0_7, %c0_8], %15 {strides = array<i32>} : memref<2x1024xf32, #tpu.memory_space<vmem>>, vector<2x1024xf32>,
    return
  }
  func.func @transform_0(%arg0: i32) -> (i32, i32) {
    %c0_i32 = arith.constant 0 : i32
    %c0_i32_0 = arith.constant 0 : i32
    return %arg0, %c0_i32 : i32, i32
  }
  func.func @transform_1(%arg0: i32) -> (i32, i32) {
    %c0_i32 = arith.constant 0 : i32
    %c0_i32_0 = arith.constant 0 : i32
    return %arg0, %c0_i32 : i32, i32
  }
  func.func @transform_2(%arg0: i32) -> (i32, i32) {
    %c0_i32 = arith.constant 0 : i32
    %c0_i32_0 = arith.constant 0 : i32
    return %arg0, %c0_i32 : i32, i32
  }
}

</mosaic_0001>

<llo_original>
// kernel: _lambda_.1
$region0: #{_lambda_.1}
  #allocation0 [shape = 'u32[]', space=smem, size = 0x4, offset = 0x4, fixed_abs, tag = 'smem constant byte address 0x4 - core index']
  #allocation1 [shape = 'u32[144,128]{1,0:T(1,128)}', space=vmem, size = 0x12000, scoped, tag = 'internal scratch']
  %s0 = inlined_call_operand.vmem [shape: f32[2,1024], index: 0, kind: input, shape index: {}]
  %s1 = inlined_call_operand.vmem [shape: f32[2,1024], index: 1, kind: input, shape index: {}]
  %s2 = inlined_call_operand.vmem [shape: f32[2,1024], index: 2, kind: output, shape index: {}]
  %s3 = sld [smem:[#allocation0]]
  $region18: #{_lambda_.1} parent=0
    _
  %s5 = ssub.s32 1, %s3
  %s6 = scalar_select 0, %s5, %s3
  // Predicated region
  $region2: #{_lambda_.1} parent=0 // pred_check
    _
  $region3: #{_lambda_.1} parent=0 // pred_check_branch
    %8 = sbr.rel (0) target = $region5
  $region4: #{_lambda_.1} parent=0 // pred_region
    _
  $region5: #{_lambda_.1} parent=0 // pred_fallthru
    _
  // Predicated region
  $region6: #{_lambda_.1} parent=0 // pred_check
    _
  $region7: #{_lambda_.1} parent=0 // pred_check_branch
    %10 = sbr.rel (0) target = $region9
  $region8: #{_lambda_.1} parent=0 // pred_region
    _
  $region9: #{_lambda_.1} parent=0 // pred_fallthru
    _
  %v11 = vld [vmem:[%s0] sm:$0xff]
  %v12 = vld [vmem:[%s0 + $0x8] sm:$0xff]
  %v13 = vld [vmem:[%s1] sm:$0xff]
  %v14 = vld [vmem:[%s1 + $0x8] sm:$0xff]
  %v15 = vsub.f32 %v11, %v13
  %v16 = vsub.f32 %v12, %v14
  %v17 = vand.u32 2147483647, %v15
  %v18 = vand.u32 2147483647, %v16
  %v19 = vmul.f32 %v17, 4.5
  %v20 = vmul.f32 %v18, 4.5
  %v21 = vmul.f32 %v19, %v17
  %v22 = vmul.f32 %v20, %v18
  %v23 = vsub.f32 %v17, 0.055555556
  %v24 = vsub.f32 %v18, 0.055555556
  %vm25 = vcmp.le.f32.partialorder %v17, 0.11111111
  %vm26 = vcmp.le.f32.partialorder %v18, 0.11111111
  %v27 = vsel %vm25, %v21, %v23
  %v28 = vsel %vm26, %v22, %v24
  %vm29 = vcmp.le.f32.partialorder %v17, 0.01
  %vm30 = vcmp.le.f32.partialorder %v18, 0.01
  %v31 = vsel %vm29, 0.0, %v27
  %v32 = vsel %vm30, 0.0, %v28
  %33 = vst [vmem:[%s2] sm:$0xff] %v31
  %34 = vst [vmem:[%s2 + $0x8] sm:$0xff] %v32
  // Predicated region
  $region10: #{_lambda_.1} parent=0 // pred_check
    _
  $region11: #{_lambda_.1} parent=0 // pred_check_branch
    %36 = sbr.rel (0) target = $region13
  $region12: #{_lambda_.1} parent=0 // pred_region
    _
  $region13: #{_lambda_.1} parent=0 // pred_fallthru
    _
  // Predicated region
  $region14: #{_lambda_.1} parent=0 // pred_check
    _
  $region15: #{_lambda_.1} parent=0 // pred_check_branch
    %38 = sbr.rel (0) target = $region17
  $region16: #{_lambda_.1} parent=0 // pred_region
    _
  $region17: #{_lambda_.1} parent=0 // pred_fallthru
    _

</llo_original>
